<compile_context>
chip_gen: v5e
topology: v5e:2x2
jax: 0.10.0
libtpu: 0.0.40
codegen_flags: <defaults>
</compile_context>

<pallas_src>
import jax
import jax.numpy as jnp
from jax.experimental import pallas as pl
from jax.experimental.pallas import tpu as pltpu


def _stce_kernel(x_ref, t_ref, out_ref, acc_ref):
    """One (tile_n, C) row tile: accumulate per-row -sum_c(t * log_softmax(x))."""
    i = pl.program_id(1)  # row-tile step within this chunk (reduction axis)

    @pl.when(i == 0)
    def _():
        acc_ref[...] = jnp.zeros_like(acc_ref)

    x = x_ref[...].astype(jnp.float32)  # (tile_n, C)
    t = t_ref[...].astype(jnp.float32)  # (tile_n, C)

    # numerically stable log-softmax pieces; never materialize log_probs
    m = jnp.max(x, axis=-1, keepdims=True)                            # (tile_n, 1)
    shifted = x - m                                                   # (tile_n, C)
    lse = jnp.log(jnp.sum(jnp.exp(shifted), axis=-1, keepdims=True))  # (tile_n, 1)
    # -t * log_softmax(x) == t * (lse - shifted); reduce classes per row
    acc_ref[...] += jnp.sum(t * (lse - shifted), axis=-1, keepdims=True)

    @pl.when(i == pl.num_programs(1) - 1)
    def _():
        out_ref[...] = acc_ref[...]


def _vmem_capacity_bytes():
    try:
        return int(pltpu.get_tpu_info().vmem_capacity_bytes)
    except Exception:
        return 64 * 1024 * 1024  # conservative fallback (v7x per-core VMEM)


def soft_target_cross_entropy(x, target, *, tile_n=None):
    """Scalar f32 loss matching PyTorch SoftTargetCrossEntropy (dim=-1)."""
    assert x.shape == target.shape, "x and target must have the same shape"
    c = x.shape[-1]
    x2 = x.reshape(-1, c)
    t2 = target.reshape(-1, c)
    n = x2.shape[0]

    in_itemsize = x2.dtype.itemsize + t2.dtype.itemsize  # bytes/row-elem, both inputs

    # ---- tile selection: biggest row tile that fits ~half of VMEM -----------
    if tile_n is None:
        budget = _vmem_capacity_bytes() // 2       # headroom: scratch/out/temps
        per_row = 2 * c * in_itemsize              # 2 pipeline buffers per input
        tile_n = max(budget // max(per_row, 1), 16)
        tile_n = min(tile_n, 2048)
    tile_n = min(tile_n, -(-n // 16) * 16)         # no bigger than (rounded) n
    tile_n = max((tile_n // 16) * 16, 16)          # multiple of 16 (f32 & bf16 tiling)

    n_tiles = -(-n // tile_n)
    num_parallel = 2 if n_tiles >= 2 else 1        # split rows across TCs (v7x)
    n_tiles_pad = -(-n_tiles // num_parallel) * num_parallel
    tiles_per_chunk = n_tiles_pad // num_parallel
    n_pad = n_tiles_pad * tile_n

    if n_pad != n:
        # zero-padded rows have target == 0 -> contribute 0 to the loss sum
        x2 = jnp.pad(x2, ((0, n_pad - n), (0, 0)))
        t2 = jnp.pad(t2, ((0, n_pad - n), (0, 0)))

    # ---- VMEM limit: double-buffered inputs + accumulator/output + margin ----
    need = 2 * tile_n * c * in_itemsize + 8 * tile_n * 4 + (4 << 20)
    vmem_limit = int(min(_vmem_capacity_bytes(), need + (8 << 20)))

    in_spec = pl.BlockSpec((tile_n, c), lambda p, i: (p * tiles_per_chunk + i, 0))

    partial = pl.pallas_call(
        _stce_kernel,
        out_shape=jax.ShapeDtypeStruct((num_parallel * tile_n, 1), jnp.float32),
        grid_spec=pltpu.PrefetchScalarGridSpec(
            num_scalar_prefetch=0,
            grid=(num_parallel, tiles_per_chunk),
            in_specs=[in_spec, in_spec],
            out_specs=pl.BlockSpec((tile_n, 1), lambda p, i: (p, 0)),
            scratch_shapes=[pltpu.VMEM((tile_n, 1), jnp.float32)],
        ),
        compiler_params=pltpu.CompilerParams(
            dimension_semantics=("parallel", "arbitrary"),
            vmem_limit_bytes=vmem_limit,
        ),
    )(x2, t2)

    # final scalar reduce + mean over the *true* row count (padded rows are 0)
    return jnp.sum(partial) / jnp.float32(n)


def _reference(x, target):
    logp = jax.nn.log_softmax(x.astype(jnp.float32), axis=-1)
    loss = jnp.sum(-target.astype(jnp.float32) * logp, axis=-1)
    return jnp.mean(loss)


if __name__ == "__main__":
    key = jax.random.PRNGKey(0)
    kx, kt = jax.random.split(key)

    # Case 1: small f32 (N, C) soft-target batch.
    N, C = 16, 32
    x = jax.random.normal(kx, (N, C), dtype=jnp.float32)
    target = jax.nn.softmax(jax.random.normal(kt, (N, C), dtype=jnp.float32), axis=-1)

    loss = soft_target_cross_entropy(x, target)
    jax.block_until_ready(loss)
    ref = _reference(x, target)
    assert jnp.allclose(loss, ref, atol=1e-5, rtol=1e-5), (loss, ref)

    # Case 2: ragged row count + bf16 inputs (exercises padding + dtype path).
    kx2, kt2 = jax.random.split(kt)
    N2, C2 = 25, 160
    xb = jax.random.normal(kx2, (N2, C2), dtype=jnp.float32).astype(jnp.bfloat16)
    tb = jax.nn.softmax(
        jax.random.normal(kt2, (N2, C2), dtype=jnp.float32), axis=-1
    ).astype(jnp.bfloat16)

    loss2 = soft_target_cross_entropy(xb, tb)
    jax.block_until_ready(loss2)
    ref2 = _reference(xb, tb)
    assert jnp.allclose(loss2, ref2, atol=1e-4, rtol=1e-4), (loss2, ref2)

    # TODO(synk): for vocab-scale C (>=8k) add a second "arbitrary" grid axis
    # over classes with an online (flash-style) log-sum-exp so (tile_n, C)
    # blocks are not required to fit VMEM in one piece.

    print("KERNEL_OK")
</pallas_src>

<mosaic_0001>
module attributes {stable_mosaic.version = 11 : i64} {
  func.func @_stce_kernel(%arg0: i32, %arg1: i32, %arg2: memref<16x32xf32, #tpu.memory_space<vmem>>, %arg3: memref<16x32xf32, #tpu.memory_space<vmem>>, %arg4: memref<16x1xf32, #tpu.memory_space<vmem>>, %arg5: memref<16x1xf32, #tpu.memory_space<vmem>>) attributes {dimension_semantics = [#tpu.dimension_semantics<parallel>, #tpu.dimension_semantics<arbitrary>], iteration_bounds = array<i64: 1, 1>, scalar_prefetch = 0 : i64, scratch_operands = 1 : i64, tpu.core_type = #tpu.core_type<tc>, window_params = [{transform_indices = @transform_0, window_bounds = array<i64: 16, 32>}, {transform_indices = @transform_1, window_bounds = array<i64: 16, 32>}, {transform_indices = @transform_2, window_bounds = array<i64: 16, 1>}]} {
    %c0_i32 = arith.constant 0 : i32
    %0 = arith.cmpi eq, %arg1, %c0_i32 : i32
    %1 = arith.extui %0 : i1 to i32
    %c0_i32_0 = arith.constant 0 : i32
    %2 = arith.cmpi ne, %1, %c0_i32_0 : i32
    scf.if %2 {
      %cst_12 = arith.constant 0.000000e+00 : f32
      %24 = vector.broadcast %cst_12 : f32 to vector<16x1xf32>
      %c0_13 = arith.constant 0 : index
      %c0_14 = arith.constant 0 : index
      %25 = vector.load %arg5[%c0_13, %c0_14] : memref<16x1xf32, #tpu.memory_space<vmem>>, vector<16x1xf32>
      tpu.vector_store %arg5[%c0_13, %c0_14], %24 {strides = array<i32>} : memref<16x1xf32, #tpu.memory_space<vmem>>, vector<16x1xf32>,
    } else {
    }
    %c0 = arith.constant 0 : index
    %c0_1 = arith.constant 0 : index
    %3 = vector.load %arg2[%c0, %c0_1] : memref<16x32xf32, #tpu.memory_space<vmem>>, vector<16x32xf32>
    %c0_2 = arith.constant 0 : index
    %c0_3 = arith.constant 0 : index
    %4 = vector.load %arg3[%c0_2, %c0_3] : memref<16x32xf32, #tpu.memory_space<vmem>>, vector<16x32xf32>
    %cst = arith.constant dense<0xFF800000> : vector<16xf32>
    %5 = vector.multi_reduction <maximumf>, %3, %cst [1] : vector<16x32xf32> to vector<16xf32>
    %6 = vector.shape_cast %5 : vector<16xf32> to vector<16x1xf32>
    %7 = vector.broadcast %6 : vector<16x1xf32> to vector<16x32xf32>
    %8 = arith.subf %3, %7 : vector<16x32xf32>
    %9 = math.exp %8 : vector<16x32xf32>
    %cst_4 = arith.constant dense<0.000000e+00> : vector<16xf32>
    %10 = vector.multi_reduction <add>, %9, %cst_4 [1] : vector<16x32xf32> to vector<16xf32>
    %11 = vector.shape_cast %10 : vector<16xf32> to vector<16x1xf32>
    %12 = math.log %11 : vector<16x1xf32>
    %c0_5 = arith.constant 0 : index
    %c0_6 = arith.constant 0 : index
    %13 = vector.load %arg5[%c0_5, %c0_6] : memref<16x1xf32, #tpu.memory_space<vmem>>, vector<16x1xf32>
    %14 = vector.broadcast %12 : vector<16x1xf32> to vector<16x32xf32>
    %15 = arith.subf %14, %8 : vector<16x32xf32>
    %16 = arith.mulf %4, %15 : vector<16x32xf32>
    %cst_7 = arith.constant dense<0.000000e+00> : vector<16xf32>
    %17 = vector.multi_reduction <add>, %16, %cst_7 [1] : vector<16x32xf32> to vector<16xf32>
    %18 = vector.shape_cast %17 : vector<16xf32> to vector<16x1xf32>
    %19 = arith.addf %13, %18 : vector<16x1xf32>
    %c0_8 = arith.constant 0 : index
    %c0_9 = arith.constant 0 : index
    %20 = vector.load %arg5[%c0_8, %c0_9] : memref<16x1xf32, #tpu.memory_space<vmem>>, vector<16x1xf32>
    tpu.vector_store %arg5[%c0_8, %c0_9], %19 {strides = array<i32>} : memref<16x1xf32, #tpu.memory_space<vmem>>, vector<16x1xf32>,
    %c0_i32_10 = arith.constant 0 : i32
    %21 = arith.cmpi eq, %arg1, %c0_i32_10 : i32
    %22 = arith.extui %21 : i1 to i32
    %c0_i32_11 = arith.constant 0 : i32
    %23 = arith.cmpi ne, %22, %c0_i32_11 : i32
    scf.if %23 {
      %c0_12 = arith.constant 0 : index
      %c0_13 = arith.constant 0 : index
      %24 = vector.load %arg5[%c0_12, %c0_13] : memref<16x1xf32, #tpu.memory_space<vmem>>, vector<16x1xf32>
      %c0_14 = arith.constant 0 : index
      %c0_15 = arith.constant 0 : index
      %25 = vector.load %arg4[%c0_14, %c0_15] : memref<16x1xf32, #tpu.memory_space<vmem>>, vector<16x1xf32>
      tpu.vector_store %arg4[%c0_14, %c0_15], %24 {strides = array<i32>} : memref<16x1xf32, #tpu.memory_space<vmem>>, vector<16x1xf32>,
    } else {
    }
    return
  }
  func.func @transform_0(%arg0: i32, %arg1: i32) -> (i32, i32) {
    %c1_i32 = arith.constant 1 : i32
    %0 = arith.muli %arg0, %c1_i32 : i32
    %1 = arith.addi %0, %arg1 : i32
    %c0_i32 = arith.constant 0 : i32
    %c0_i32_0 = arith.constant 0 : i32
    return %1, %c0_i32 : i32, i32
  }
  func.func @transform_1(%arg0: i32, %arg1: i32) -> (i32, i32) {
    %c1_i32 = arith.constant 1 : i32
    %0 = arith.muli %arg0, %c1_i32 : i32
    %1 = arith.addi %0, %arg1 : i32
    %c0_i32 = arith.constant 0 : i32
    %c0_i32_0 = arith.constant 0 : i32
    return %1, %c0_i32 : i32, i32
  }
  func.func @transform_2(%arg0: i32, %arg1: i32) -> (i32, i32) {
    %c0_i32 = arith.constant 0 : i32
    %c0_i32_0 = arith.constant 0 : i32
    return %arg0, %c0_i32 : i32, i32
  }
}

</mosaic_0001>

<llo_original>
// kernel: tpu_custom_call.1
$region0: #{tpu_custom_call.1}
  #allocation0 [shape = 'u32[]', space=smem, size = 0x4, offset = 0x4, fixed_abs, tag = 'smem constant byte address 0x4 - core index']
  #allocation1 [shape = 'u32[72,128]{1,0:T(1,128)}', space=vmem, size = 0x9000, scoped, tag = 'internal scratch']
  #allocation2 [shape = 'f32[16,1]{1,0:T(8,128)}', space=vmem, size = 0x2000, scoped, tag = 'scratch operand']
  %s0 = inlined_call_operand.hbm [shape: f32[16,32], index: 0, kind: input, shape index: {}]
  %s1 = inlined_call_operand.hbm [shape: f32[16,32], index: 1, kind: input, shape index: {}]
  %s2 = inlined_call_operand.vmem [shape: f32[16,1], index: 2, kind: output, shape index: {}]
  %s3 = sld [smem:[#allocation0]]
  $region34: #{tpu_custom_call.1} parent=0
    _
  %s5 = ssub.s32 1, %s3
  %s6 = scalar_select 0, %s5, %s3
  $region1: #{tpu_custom_call.1} parent=0
    #allocation3 [shape = 'u8[8192]{0}', space=vmem, size = 0x2000, scoped, tag = 'input window, operand 0, single buffered']
    #allocation4 [shape = 's32[1]{0}', space=sflag, size = 0x4, scoped, tag = 'scoped memory for tpu_custom_call.1']
    #allocation5 [shape = 'u8[8192]{0}', space=vmem, size = 0x2000, scoped, tag = 'input window, operand 1, single buffered']
    #allocation6 [shape = 's32[1]{0}', space=sflag, size = 0x4, scoped, tag = 'scoped memory for tpu_custom_call.1']
    %7 = vsyncpa [#allocation4], 0
    %8 = vsyncpa [#allocation6], 0
    // Predicated region
    $region2: #{tpu_custom_call.1} parent=1 // pred_check
      _
    $region3: #{tpu_custom_call.1} parent=1 // pred_check_branch
      %10 = sbr.rel (0) target = $region5
    $region4: #{tpu_custom_call.1} parent=1 // pred_region
      %s11 = sadd.s32 0, 0
      %s12 = smul.u32 2, %s11
      %14 = vsyncadd [#allocation4], 0
      %s15 = smul.addr %s12, 8
      %s16 = scalar_lea.hbm %s0, %s15
      %s17 = sshll.u32 %s16, 4
      %s18 = int_to_ptr.hbm [resolvable:$true] %s17
      %s19 = sshll.u32 [#allocation3], 4
      %s20 = int_to_ptr.vmem [resolvable:$true] %s19
      %25 = dma.hbm_to_vmem [thread:$0]  %s18, 256, %s20, [#allocation4], 128, 128, 8
    $region5: #{tpu_custom_call.1} parent=1 // pred_fallthru
      _
    // Predicated region
    $region6: #{tpu_custom_call.1} parent=1 // pred_check
      _
    $region7: #{tpu_custom_call.1} parent=1 // pred_check_branch
      %27 = sbr.rel (0) target = $region9
    $region8: #{tpu_custom_call.1} parent=1 // pred_region
      %s28 = sadd.s32 0, 0
      %s29 = smul.u32 2, %s28
      %31 = vsyncadd [#allocation6], 0
      %s32 = smul.addr %s29, 8
      %s33 = scalar_lea.hbm %s1, %s32
      %s34 = sshll.u32 %s33, 4
      %s35 = int_to_ptr.hbm [resolvable:$true] %s34
      %s36 = sshll.u32 [#allocation5], 4
      %s37 = int_to_ptr.vmem [resolvable:$true] %s36
      %42 = dma.hbm_to_vmem [thread:$0]  %s35, 256, %s37, [#allocation6], 128, 128, 8
    $region9: #{tpu_custom_call.1} parent=1 // pred_fallthru
      _
    // Predicated region
    $region10: #{tpu_custom_call.1} parent=1 // pred_check
      _
    $region11: #{tpu_custom_call.1} parent=1 // pred_check_branch
      %44 = sbr.rel (0) target = $region13
    $region12: #{tpu_custom_call.1} parent=1 // pred_region
      %46 = dma.done [#allocation4], 256
    $region13: #{tpu_custom_call.1} parent=1 // pred_fallthru
      _
    // Predicated region
    $region14: #{tpu_custom_call.1} parent=1 // pred_check
      _
    $region15: #{tpu_custom_call.1} parent=1 // pred_check_branch
      %48 = sbr.rel (0) target = $region17
    $region16: #{tpu_custom_call.1} parent=1 // pred_region
      %50 = dma.done [#allocation6], 256
    $region17: #{tpu_custom_call.1} parent=1 // pred_fallthru
      _
    %s51 = sadd.s32 0, 0
    %s52 = smul.u32 2, %s51
    %s53 = sadd.s32 0, 0
    %s54 = smul.u32 2, %s53
    %p55 = scmp.eq.s32.totalorder 0, 0
    // Predicated region
    $region18: #{tpu_custom_call.1} parent=1 // pred_check
      %p56 = pneg %p55
    $region19: #{tpu_custom_call.1} parent=1 // pred_check_branch
      %58 = sbr.rel (%p56) target = $region21
    $region20: #{tpu_custom_call.1} parent=1 // pred_region
      %vm59 = vcmask 7168
      %60 = vst.msk [vmem:[#allocation2] sm:$0xff] %vm59, 0.0
      %61 = vst.msk [vmem:[#allocation2 + $0x8] sm:$0xff] %vm59, 0.0
    $region21: #{tpu_custom_call.1} parent=1 // pred_fallthru
      _
    %v62 = vld [vmem:[#allocation3] sm:$0xff]
    %v63 = vld [vmem:[#allocation3 + $0x8] sm:$0xff]
    %v64 = vld [vmem:[#allocation5] sm:$0xff]
    %v65 = vld [vmem:[#allocation5 + $0x8] sm:$0xff]
    %vm66 = vcmask 261120
    %v67 = vsel %vm66, %v62, -inf
    %68 = vmax.xlane.f32.xlu0 %v67
    %v69 = vpop.xlane.xlu0 %68
    %v70 = vsel %vm66, %v63, -inf
    %71 = vmax.xlane.f32.xlu0 %v70
    %v72 = vpop.xlane.xlu0 %71
    %v73 = vsub.f32 %v62, %v69
    %v74 = vsub.f32 %v63, %v72
    %v75 = vmul.f32 %v73, 1.442695
    %v76 = vpow.pop %v75
    %v77 = vmul.f32 %v74, 1.442695
    %v78 = vpow.pop %v77
    %v79 = vsel %vm66, %v76, 0.0
    %80 = vadd.xlane.f32.xlu0 %v79
    %v81 = vpop.xlane.xlu0 %80
    %v82 = vsel %vm66, %v78, 0.0
    %83 = vadd.xlane.f32.xlu0 %v82
    %v84 = vpop.xlane.xlu0 %83
    %v85 = vlog2.pop %v81
    %v86 = vmul.f32 %v85, 0.6931472
    %v87 = vlog2.pop %v84
    %v88 = vmul.f32 %v87, 0.6931472
    %v89 = vld [vmem:[#allocation2] sm:$0xff]
    %v90 = vld [vmem:[#allocation2 + $0x8] sm:$0xff]
    %v91 = vsub.f32 %v86, %v73
    %v92 = vsub.f32 %v88, %v74
    %v93 = vmul.f32 %v64, %v91
    %v94 = vmul.f32 %v65, %v92
    %v95 = vsel %vm66, %v93, 0.0
    %96 = vadd.xlane.f32.xlu0 %v95
    %v97 = vpop.xlane.xlu0 %96
    %v98 = vsel %vm66, %v94, 0.0
    %99 = vadd.xlane.f32.xlu0 %v98
    %v100 = vpop.xlane.xlu0 %99
    %v101 = vadd.f32 %v89, %v97
    %v102 = vadd.f32 %v90, %v100
    %vm103 = vcmask 7168
    %104 = vst.msk [vmem:[#allocation2] sm:$0xff] %vm103, %v101
    %105 = vst.msk [vmem:[#allocation2 + $0x8] sm:$0xff] %vm103, %v102
    // Predicated region
    $region22: #{tpu_custom_call.1} parent=1 // pred_check
      %p106 = pneg %p55
    $region23: #{tpu_custom_call.1} parent=1 // pred_check_branch
      %108 = sbr.rel (%p106) target = $region25
    $region24: #{tpu_custom_call.1} parent=1 // pred_region
      %v109 = vld [vmem:[#allocation2] sm:$0xff]
      %v110 = vld [vmem:[#allocation2 + $0x8] sm:$0xff]
      %111 = vst.msk [vmem:[%s2] sm:$0xff] %vm103, %v109
      %112 = vst.msk [vmem:[%s2 + $0x8] sm:$0xff] %vm103, %v110
    $region25: #{tpu_custom_call.1} parent=1 // pred_fallthru
      _
    // Predicated region
    $region26: #{tpu_custom_call.1} parent=1 // pred_check
      _
    $region27: #{tpu_custom_call.1} parent=1 // pred_check_branch
      %114 = sbr.rel (0) target = $region29
    $region28: #{tpu_custom_call.1} parent=1 // pred_region
      _
    $region29: #{tpu_custom_call.1} parent=1 // pred_fallthru
      _
    // Predicated region
    $region30: #{tpu_custom_call.1} parent=1 // pred_check
      _
    $region31: #{tpu_custom_call.1} parent=1 // pred_check_branch
      %116 = sbr.rel (0) target = $region33
    $region32: #{tpu_custom_call.1} parent=1 // pred_region
      _
    $region33: #{tpu_custom_call.1} parent=1 // pred_fallthru
      _
    %117 = vsyncpa [#allocation4], 1
    %118 = vsyncpa [#allocation6], 1

</llo_original>
